<compile_context>
chip_gen: v7x
topology: tpu7x:2x2x1
jax: 0.10.0
libtpu: 0.0.40
codegen_flags: <defaults>
</compile_context>

<pallas_src>
import numpy as np
import jax
import jax.numpy as jnp
from jax.experimental import pallas as pl
from jax.experimental.pallas import tpu as pltpu

_LANE = 128        # lane width: the obs tile must be a multiple of this
_MAX_TILE = 512    # cap on the batch tile (rows gathered per grid step)
_ROW_TILE = 8      # batch tile of the fallback row-copy kernel


def _round_up(x: int, m: int) -> int:
    return ((x + m - 1) // m) * m


def _choose_tile(batch: int) -> int:
    """Pick a lane-aligned batch tile.

    Big enough to amortize the ~0.35us/step grid overhead, but on v7x (2
    TensorCores; the grid axis is marked "parallel") keep at least 2 grid
    steps when the batch is large enough to split.
    """
    raw = _round_up(max(batch, 1), _LANE)
    tile = min(_MAX_TILE, raw)
    if raw >= 2 * _LANE and raw // tile < 2:
        tile = max(_LANE, _round_up(raw // 2, _LANE))
    return tile


def _vmem_limit_bytes(n_states, n_actions, tile, table_itemsize):
    table_b = n_states * n_actions * table_itemsize
    # Resident table (pipeline double-buffers it) + obs/out double buffers.
    need = 2 * table_b + 2 * tile * 4 + 2 * tile * n_actions * 4 + (1 << 20)
    if need <= (16 << 20):        # fits v5e's default scoped VMEM limit
        return None
    # TODO(synk): for Q-tables too large to sit resident in VMEM (esp. v7x's
    # 64 MiB), keep the table in HBM (memory_space=pl.ANY) and async-copy only
    # the selected rows into a small double-buffered scratch; also consider a
    # single-buffered table block and/or a bf16 table with in-kernel cast.
    return int(min(need, 64 << 20))


# --------------------------- primary (vectorized) ---------------------------

def _gather_take_kernel(obs_ref, table_ref, q_ref):
    """One vectorized row gather per batch tile.

    obs_ref   : (1, TILE) int32 in VMEM  -- state indices for this tile
    table_ref : (S, A)    float  in VMEM -- full Q-table (constant block index)
    q_ref     : (TILE, A) float32        -- gathered Q-values
    """
    idx = obs_ref[0, :]                                   # (TILE,) int32
    idx = jnp.clip(idx, 0, table_ref.shape[0] - 1)        # clamp folded in-kernel
    rows = jnp.take(table_ref[...], idx, axis=0,
                    mode="promise_in_bounds")             # (TILE, A) sublane gather
    q_ref[...] = rows.astype(q_ref.dtype)
    # TODO(synk): for n_actions << 128 a lane-dense (A, B) output layout with
    # an (A, S) table would avoid masked partial stores entirely.


def _forward_take(obs_i32, q_table, tile):
    n_states, n_actions = q_table.shape
    batch = obs_i32.shape[0]
    b_pad = _round_up(batch, tile)
    if b_pad != batch:
        obs_i32 = jnp.pad(obs_i32, (0, b_pad - batch))    # pad rows gather state 0
    obs2d = obs_i32.reshape(1, b_pad)

    q_pad = pl.pallas_call(
        _gather_take_kernel,
        out_shape=jax.ShapeDtypeStruct((b_pad, n_actions), jnp.float32),
        grid=(b_pad // tile,),
        in_specs=[
            # obs indices: lane-aligned (1, tile) int32 block per grid step.
            pl.BlockSpec((1, tile), lambda i: (0, i)),
            # Q-table: full-array block, constant block index => DMA'd to VMEM
            # once and reused by every batch tile.
            pl.BlockSpec((n_states, n_actions), lambda i: (0, 0)),
        ],
        out_specs=pl.BlockSpec((tile, n_actions), lambda i: (i, 0)),
        compiler_params=pltpu.CompilerParams(
            dimension_semantics=("parallel",),
            vmem_limit_bytes=_vmem_limit_bytes(
                n_states, n_actions, tile, q_table.dtype.itemsize),
        ),
        cost_estimate=pl.CostEstimate(
            flops=0,
            transcendentals=0,
            bytes_accessed=(n_states * n_actions * q_table.dtype.itemsize
                            + b_pad * 4 + b_pad * n_actions * 4),
        ),
    )(obs2d, q_table)
    return q_pad[:batch]


# ------------------------ fallback (row-copy, known-good) -------------------

def _gather_rows_kernel(obs_ref, table_ref, q_ref):
    """Fallback: _ROW_TILE scalar-indexed (1, A) row copies per grid step."""
    tile = pl.program_id(0)
    n_states = table_ref.shape[0]
    for j in range(_ROW_TILE):                      # static unroll: 8 tiny copies
        s = obs_ref[tile * _ROW_TILE + j]           # SMEM scalar read
        s = jnp.clip(s, 0, n_states - 1)
        q_ref[j:j + 1, :] = table_ref[pl.ds(s, 1), :].astype(q_ref.dtype)


def _forward_rowcopy(obs_i32, q_table):
    n_states, n_actions = q_table.shape
    batch = obs_i32.shape[0]
    b_pad = _round_up(batch, _ROW_TILE)
    if b_pad != batch:
        obs_i32 = jnp.pad(obs_i32, (0, b_pad - batch))

    q_pad = pl.pallas_call(
        _gather_rows_kernel,
        out_shape=jax.ShapeDtypeStruct((b_pad, n_actions), jnp.float32),
        grid_spec=pltpu.PrefetchScalarGridSpec(
            num_scalar_prefetch=1,                  # obs indices -> SMEM
            grid=(b_pad // _ROW_TILE,),
            in_specs=[pl.BlockSpec((n_states, n_actions), lambda i, obs: (0, 0))],
            out_specs=pl.BlockSpec((_ROW_TILE, n_actions), lambda i, obs: (i, 0)),
        ),
        compiler_params=pltpu.CompilerParams(dimension_semantics=("parallel",)),
        cost_estimate=pl.CostEstimate(
            flops=0, transcendentals=0,
            bytes_accessed=(n_states * n_actions * q_table.dtype.itemsize
                            + b_pad * 4 + b_pad * n_actions * 4)),
    )(obs_i32, q_table)
    return q_pad[:batch]


# ---------------------------------- wrapper ---------------------------------

_VECTOR_GATHER_BROKEN = False   # set if jnp.take fails to lower on this Mosaic


def dqn_tab_forward(obs_idx: jax.Array, q_table: jax.Array, *,
                    use_pallas: bool | None = None) -> jax.Array:
    """Q-values for integer observations: q[b, :] = q_table[obs[b], :].

    obs_idx : (B,) integer state indices (the raw discrete observations).
    q_table : (n_states, n_actions) float -- the Linear weight stored
              transposed ONCE at init (q_table == W.T), never per call.
    returns (B, n_actions) float32, identical to one_hot(obs) @ W.T.

    use_pallas: None = auto (tiny problems route to a plain XLA gather, where
    the pallas_call launch/DMA overhead dominates); True/False forces a path.
    Note: out-of-range indices are clamped (PyTorch would raise instead).
    """
    global _VECTOR_GATHER_BROKEN
    n_states, n_actions = q_table.shape
    batch = obs_idx.shape[0]
    obs_i32 = obs_idx.astype(jnp.int32)

    if use_pallas is None:
        table_bytes = n_states * n_actions * q_table.dtype.itemsize
        use_pallas = batch >= 256 or table_bytes >= (1 << 20)

    if not use_pallas:
        safe = jnp.clip(obs_i32, 0, n_states - 1)
        return jnp.take(q_table, safe, axis=0).astype(jnp.float32)

    if not _VECTOR_GATHER_BROKEN:
        try:
            return _forward_take(obs_i32, q_table, _choose_tile(batch))
        except Exception:
            # Vectorized in-kernel gather not supported by this jax/Mosaic
            # version -- fall back to the scalar-indexed row-copy kernel.
            _VECTOR_GATHER_BROKEN = True
    return _forward_rowcopy(obs_i32, q_table)


if __name__ == "__main__":
    # Small deterministic problem consistent with DqnTab:
    # Discrete ob_space (n_states) -> Discrete ac_space (n_actions).
    n_states = 64
    n_actions = 8
    batch = 200            # not a tile multiple: exercises padding + 2 grid steps
    initial_q = 1.0        # nn.init.constant(self.q_values.weight, initial_q)

    k_obs, k_pert = jax.random.split(jax.random.PRNGKey(0))
    obs = jax.random.randint(k_obs, (batch,), 0, n_states, dtype=jnp.int32)

    # Parameter kept permanently state-major: q_table == W.T (no per-call .T).
    # Constant init plus a small deterministic perturbation so the check below
    # is non-trivial (a constant table would hide gather-index bugs).
    pert = 0.01 * jax.random.normal(k_pert, (n_states, n_actions), dtype=jnp.float32)
    q_table = jnp.full((n_states, n_actions), initial_q, dtype=jnp.float32) + pert

    # Force the Pallas path (the auto heuristic would route this toy size to XLA).
    q = dqn_tab_forward(obs, q_table, use_pallas=True)
    q = jax.block_until_ready(q)

    # Reference: original module math (one-hot @ W.T, W in PyTorch Linear layout).
    weight = q_table.T                                   # (n_actions, n_states)
    one_hot = jax.nn.one_hot(obs, n_states, dtype=jnp.float32)
    q_ref = one_hot @ weight.T
    np.testing.assert_allclose(np.asarray(q), np.asarray(q_ref),
                               rtol=1e-6, atol=1e-6)
    assert q.shape == (batch, n_actions)

    # Auto-dispatch path (tiny problem -> plain XLA gather) stays consistent.
    q_small = jax.block_until_ready(dqn_tab_forward(obs[:4], q_table))
    np.testing.assert_allclose(np.asarray(q_small), np.asarray(q_ref[:4]),
                               rtol=1e-6, atol=1e-6)

    print("KERNEL_OK")
</pallas_src>

<mosaic_0001>
module attributes {stable_mosaic.version = 11 : i64} {
  func.func @_gather_rows_kernel(%arg0: i32, %arg1: memref<200xi32, #tpu.memory_space<smem>>, %arg2: memref<64x8xf32, #tpu.memory_space<vmem>>, %arg3: memref<8x8xf32, #tpu.memory_space<vmem>>) attributes {dimension_semantics = [#tpu.dimension_semantics<parallel>], iteration_bounds = array<i64: 25>, scalar_prefetch = 1 : i64, scratch_operands = 0 : i64, tpu.core_type = #tpu.core_type<tc>, window_params = [{pipeline_mode = #tpu.pipeline_mode<synchronous>, transform_indices = @transform_0, window_bounds = array<i64: 64, 8>}, {transform_indices = @transform_1, window_bounds = array<i64: 8, 8>}]} {
    %c8_i32 = arith.constant 8 : i32
    %0 = arith.muli %arg0, %c8_i32 : i32
    %c0_i32 = arith.constant 0 : i32
    %1 = arith.addi %0, %c0_i32 : i32
    %2 = arith.index_cast %1 : i32 to index
    %3 = memref.load %arg1[%2] : memref<200xi32, #tpu.memory_space<smem>>
    %c0_i32_0 = arith.constant 0 : i32
    %c63_i32 = arith.constant 63 : i32
    %4 = arith.maxsi %c0_i32_0, %3 : i32
    %5 = arith.minsi %c63_i32, %4 : i32
    %6 = arith.index_cast %5 : i32 to index
    %c0 = arith.constant 0 : index
    %7 = vector.load %arg2[%6, %c0] : memref<64x8xf32, #tpu.memory_space<vmem>>, vector<1x8xf32>
    %c0_1 = arith.constant 0 : index
    %c0_2 = arith.constant 0 : index
    %8 = vector.load %arg3[%c0_1, %c0_2] : memref<8x8xf32, #tpu.memory_space<vmem>>, vector<1x8xf32>
    tpu.vector_store %arg3[%c0_1, %c0_2], %7 {strides = array<i32>} : memref<8x8xf32, #tpu.memory_space<vmem>>, vector<1x8xf32>,
    %c8_i32_3 = arith.constant 8 : i32
    %9 = arith.muli %arg0, %c8_i32_3 : i32
    %c1_i32 = arith.constant 1 : i32
    %10 = arith.addi %9, %c1_i32 : i32
    %11 = arith.index_cast %10 : i32 to index
    %12 = memref.load %arg1[%11] : memref<200xi32, #tpu.memory_space<smem>>
    %c0_i32_4 = arith.constant 0 : i32
    %c63_i32_5 = arith.constant 63 : i32
    %13 = arith.maxsi %c0_i32_4, %12 : i32
    %14 = arith.minsi %c63_i32_5, %13 : i32
    %15 = arith.index_cast %14 : i32 to index
    %c0_6 = arith.constant 0 : index
    %16 = vector.load %arg2[%15, %c0_6] : memref<64x8xf32, #tpu.memory_space<vmem>>, vector<1x8xf32>
    %c1 = arith.constant 1 : index
    %c0_7 = arith.constant 0 : index
    %17 = vector.load %arg3[%c1, %c0_7] : memref<8x8xf32, #tpu.memory_space<vmem>>, vector<1x8xf32>
    tpu.vector_store %arg3[%c1, %c0_7], %16 {strides = array<i32>} : memref<8x8xf32, #tpu.memory_space<vmem>>, vector<1x8xf32>,
    %c8_i32_8 = arith.constant 8 : i32
    %18 = arith.muli %arg0, %c8_i32_8 : i32
    %c2_i32 = arith.constant 2 : i32
    %19 = arith.addi %18, %c2_i32 : i32
    %20 = arith.index_cast %19 : i32 to index
    %21 = memref.load %arg1[%20] : memref<200xi32, #tpu.memory_space<smem>>
    %c0_i32_9 = arith.constant 0 : i32
    %c63_i32_10 = arith.constant 63 : i32
    %22 = arith.maxsi %c0_i32_9, %21 : i32
    %23 = arith.minsi %c63_i32_10, %22 : i32
    %24 = arith.index_cast %23 : i32 to index
    %c0_11 = arith.constant 0 : index
    %25 = vector.load %arg2[%24, %c0_11] : memref<64x8xf32, #tpu.memory_space<vmem>>, vector<1x8xf32>
    %c2 = arith.constant 2 : index
    %c0_12 = arith.constant 0 : index
    %26 = vector.load %arg3[%c2, %c0_12] : memref<8x8xf32, #tpu.memory_space<vmem>>, vector<1x8xf32>
    tpu.vector_store %arg3[%c2, %c0_12], %25 {strides = array<i32>} : memref<8x8xf32, #tpu.memory_space<vmem>>, vector<1x8xf32>,
    %c8_i32_13 = arith.constant 8 : i32
    %27 = arith.muli %arg0, %c8_i32_13 : i32
    %c3_i32 = arith.constant 3 : i32
    %28 = arith.addi %27, %c3_i32 : i32
    %29 = arith.index_cast %28 : i32 to index
    %30 = memref.load %arg1[%29] : memref<200xi32, #tpu.memory_space<smem>>
    %c0_i32_14 = arith.constant 0 : i32
    %c63_i32_15 = arith.constant 63 : i32
    %31 = arith.maxsi %c0_i32_14, %30 : i32
    %32 = arith.minsi %c63_i32_15, %31 : i32
    %33 = arith.index_cast %32 : i32 to index
    %c0_16 = arith.constant 0 : index
    %34 = vector.load %arg2[%33, %c0_16] : memref<64x8xf32, #tpu.memory_space<vmem>>, vector<1x8xf32>
    %c3 = arith.constant 3 : index
    %c0_17 = arith.constant 0 : index
    %35 = vector.load %arg3[%c3, %c0_17] : memref<8x8xf32, #tpu.memory_space<vmem>>, vector<1x8xf32>
    tpu.vector_store %arg3[%c3, %c0_17], %34 {strides = array<i32>} : memref<8x8xf32, #tpu.memory_space<vmem>>, vector<1x8xf32>,
    %c8_i32_18 = arith.constant 8 : i32
    %36 = arith.muli %arg0, %c8_i32_18 : i32
    %c4_i32 = arith.constant 4 : i32
    %37 = arith.addi %36, %c4_i32 : i32
    %38 = arith.index_cast %37 : i32 to index
    %39 = memref.load %arg1[%38] : memref<200xi32, #tpu.memory_space<smem>>
    %c0_i32_19 = arith.constant 0 : i32
    %c63_i32_20 = arith.constant 63 : i32
    %40 = arith.maxsi %c0_i32_19, %39 : i32
    %41 = arith.minsi %c63_i32_20, %40 : i32
    %42 = arith.index_cast %41 : i32 to index
    %c0_21 = arith.constant 0 : index
    %43 = vector.load %arg2[%42, %c0_21] : memref<64x8xf32, #tpu.memory_space<vmem>>, vector<1x8xf32>
    %c4 = arith.constant 4 : index
    %c0_22 = arith.constant 0 : index
    %44 = vector.load %arg3[%c4, %c0_22] : memref<8x8xf32, #tpu.memory_space<vmem>>, vector<1x8xf32>
    tpu.vector_store %arg3[%c4, %c0_22], %43 {strides = array<i32>} : memref<8x8xf32, #tpu.memory_space<vmem>>, vector<1x8xf32>,
    %c8_i32_23 = arith.constant 8 : i32
    %45 = arith.muli %arg0, %c8_i32_23 : i32
    %c5_i32 = arith.constant 5 : i32
    %46 = arith.addi %45, %c5_i32 : i32
    %47 = arith.index_cast %46 : i32 to index
    %48 = memref.load %arg1[%47] : memref<200xi32, #tpu.memory_space<smem>>
    %c0_i32_24 = arith.constant 0 : i32
    %c63_i32_25 = arith.constant 63 : i32
    %49 = arith.maxsi %c0_i32_24, %48 : i32
    %50 = arith.minsi %c63_i32_25, %49 : i32
    %51 = arith.index_cast %50 : i32 to index
    %c0_26 = arith.constant 0 : index
    %52 = vector.load %arg2[%51, %c0_26] : memref<64x8xf32, #tpu.memory_space<vmem>>, vector<1x8xf32>
    %c5 = arith.constant 5 : index
    %c0_27 = arith.constant 0 : index
    %53 = vector.load %arg3[%c5, %c0_27] : memref<8x8xf32, #tpu.memory_space<vmem>>, vector<1x8xf32>
    tpu.vector_store %arg3[%c5, %c0_27], %52 {strides = array<i32>} : memref<8x8xf32, #tpu.memory_space<vmem>>, vector<1x8xf32>,
    %c8_i32_28 = arith.constant 8 : i32
    %54 = arith.muli %arg0, %c8_i32_28 : i32
    %c6_i32 = arith.constant 6 : i32
    %55 = arith.addi %54, %c6_i32 : i32
    %56 = arith.index_cast %55 : i32 to index
    %57 = memref.load %arg1[%56] : memref<200xi32, #tpu.memory_space<smem>>
    %c0_i32_29 = arith.constant 0 : i32
    %c63_i32_30 = arith.constant 63 : i32
    %58 = arith.maxsi %c0_i32_29, %57 : i32
    %59 = arith.minsi %c63_i32_30, %58 : i32
    %60 = arith.index_cast %59 : i32 to index
    %c0_31 = arith.constant 0 : index
    %61 = vector.load %arg2[%60, %c0_31] : memref<64x8xf32, #tpu.memory_space<vmem>>, vector<1x8xf32>
    %c6 = arith.constant 6 : index
    %c0_32 = arith.constant 0 : index
    %62 = vector.load %arg3[%c6, %c0_32] : memref<8x8xf32, #tpu.memory_space<vmem>>, vector<1x8xf32>
    tpu.vector_store %arg3[%c6, %c0_32], %61 {strides = array<i32>} : memref<8x8xf32, #tpu.memory_space<vmem>>, vector<1x8xf32>,
    %c8_i32_33 = arith.constant 8 : i32
    %63 = arith.muli %arg0, %c8_i32_33 : i32
    %c7_i32 = arith.constant 7 : i32
    %64 = arith.addi %63, %c7_i32 : i32
    %65 = arith.index_cast %64 : i32 to index
    %66 = memref.load %arg1[%65] : memref<200xi32, #tpu.memory_space<smem>>
    %c0_i32_34 = arith.constant 0 : i32
    %c63_i32_35 = arith.constant 63 : i32
    %67 = arith.maxsi %c0_i32_34, %66 : i32
    %68 = arith.minsi %c63_i32_35, %67 : i32
    %69 = arith.index_cast %68 : i32 to index
    %c0_36 = arith.constant 0 : index
    %70 = vector.load %arg2[%69, %c0_36] : memref<64x8xf32, #tpu.memory_space<vmem>>, vector<1x8xf32>
    %c7 = arith.constant 7 : index
    %c0_37 = arith.constant 0 : index
    %71 = vector.load %arg3[%c7, %c0_37] : memref<8x8xf32, #tpu.memory_space<vmem>>, vector<1x8xf32>
    tpu.vector_store %arg3[%c7, %c0_37], %70 {strides = array<i32>} : memref<8x8xf32, #tpu.memory_space<vmem>>, vector<1x8xf32>,
    return
  }
  func.func @transform_0(%arg0: i32, %arg1: memref<200xi32, #tpu.memory_space<smem>>) -> (i32, i32) {
    %c0_i32 = arith.constant 0 : i32
    %c0_i32_0 = arith.constant 0 : i32
    %c0_i32_1 = arith.constant 0 : i32
    return %c0_i32, %c0_i32_0 : i32, i32
  }
  func.func @transform_1(%arg0: i32, %arg1: memref<200xi32, #tpu.memory_space<smem>>) -> (i32, i32) {
    %c0_i32 = arith.constant 0 : i32
    %c0_i32_0 = arith.constant 0 : i32
    return %arg0, %c0_i32 : i32, i32
  }
}

</mosaic_0001>

<llo_original>
// kernel: tpu_custom_call.1
$region0: #{tpu_custom_call.1}
  #allocation0 [shape = 'u32[]', space=smem, size = 0x4, offset = 0x4, fixed_abs, tag = 'smem constant byte address 0x4 - core index']
  #allocation1 [shape = 'u32[144,128]{1,0:T(1,128)}', space=vmem, size = 0x12000, scoped, tag = 'internal scratch']
  #allocation2 [shape = 's32[1]{0}', space=sflag, size = 0x4, scoped, tag = 'scoped memory for tpu_custom_call.1']
  #allocation3 [shape = 'u8[1024]{0}', space=smem, size = 0x400, scoped, tag = 'prefetched SMEM operand 0']
  %s0 = inlined_call_operand.vmem [shape: s32[200], index: 0, kind: input, shape index: {}]
  %s1 = inlined_call_operand.vmem [shape: f32[64,8], index: 1, kind: input, shape index: {}]
  %s2 = inlined_call_operand.vmem [shape: f32[200,8], index: 2, kind: output, shape index: {}]
  %s3 = sld [smem:[#allocation0]]
  $region37: #{tpu_custom_call.1} parent=0
    _
  %s5 = ssub.s32 1, %s3
  %s6 = scalar_select 0, %s5, %s3
  %s7 = sshll.u32 %s0, 4
  %s8 = int_to_ptr.vmem [resolvable:$true] %s7
  %10 = dma.vmem_to_smem %s8, 32, [#allocation3], [#allocation2]
  %11 = dma.done [#allocation2], 32
  %12 = sfence
  loop: start=0, step=1, limit=27
  $region2: #{tpu_custom_call.1} parent=0 // loop_pre_header
    _
  $region3: #{tpu_custom_call.1} parent=0 // loop_header
    %s14 = sphi 0, %s18
    %p15 = scmp.ge.s32.totalorder %s14, 27
    %s22 = sphi 0, %s22
    %s24 = sphi 0, %s22
    %s25 = sphi 0, %s24
    %s39 = sphi 0, %s25
    %s45 = sphi 0, %s47
    %s48 = sphi 0, %s45
    %s49 = sphi 0, %s48
    %s65 = sphi 0, %s49
  $region4: #{tpu_custom_call.1} parent=0 // loop_header_branch
    %17 = sbr.rel (%p15) target = $region8
  $region5: #{tpu_custom_call.1} parent=0 // loop_body
    %s19 = ssub.s32 %s14, 1
    %s20 = ssub.s32 %s14, 2
    %s21 = sadd.s32 %s14, 1
    %s23 = sadd.s32 %s22, 1
    %p26 = scmp.eq.s32.totalorder %s14, 24
    %p27 = scmp.ne.s32.totalorder %s22, %s24
    %p28 = scmp.eq.s32.totalorder %s14, 0
    %p29 = por %p27, %p28
    %p30 = scmp.ne.s32.totalorder %s22, %s24
    %p31 = scmp.eq.s32.totalorder %s19, 24
    %p32 = por %p30, %p31
    %p33 = scmp.ne.s32.totalorder %s24, %s25
    %p34 = scmp.eq.s32.totalorder %s19, 0
    %p35 = por %p33, %p34
    %p36 = scmp.ne.s32.totalorder %s24, %s25
    %p37 = scmp.eq.s32.totalorder %s20, 24
    %p38 = por %p36, %p37
    %p40 = scmp.ne.s32.totalorder %s25, %s39
    %p41 = scmp.eq.s32.totalorder %s20, 0
    %p42 = por %p40, %p41
    %s43 = ssub.s32 %s14, %s21
    %p44 = scmp.eq.s32.totalorder %s43, 0
    %s46 = sadd.s32 %s45, 1
    %s47 = scalar_select %p44, %s45, %s46
    %p50 = pneg %p44
    %p51 = scmp.eq.s32.totalorder %s14, 24
    %p52 = por %p50, %p51
    %p53 = scmp.ne.s32.totalorder %s45, %s48
    %p54 = scmp.eq.s32.totalorder %s14, 0
    %p55 = por %p53, %p54
    %p56 = scmp.ne.s32.totalorder %s45, %s48
    %p57 = scmp.eq.s32.totalorder %s19, 24
    %p58 = por %p56, %p57
    %p59 = scmp.ne.s32.totalorder %s48, %s49
    %p60 = scmp.eq.s32.totalorder %s19, 0
    %p61 = por %p59, %p60
    %p62 = scmp.ne.s32.totalorder %s48, %s49
    %p63 = scmp.eq.s32.totalorder %s20, 24
    %p64 = por %p62, %p63
    %p66 = scmp.ne.s32.totalorder %s49, %s65
    %p67 = scmp.eq.s32.totalorder %s20, 0
    %p68 = por %p66, %p67
    %p69 = scmp.le.s32.totalorder 1, %s14
    %p70 = scmp.lt.s32.totalorder %s14, 26
    %p71 = pnand %p69, %p70
    %p72 = pneg %p71
    // Predicated region
    $region9: #{tpu_custom_call.1} parent=5 // pred_check
      _
    $region10: #{tpu_custom_call.1} parent=5 // pred_check_branch
      %74 = sbr.rel (%p71) target = $region12
    $region11: #{tpu_custom_call.1} parent=5 // pred_region
      %s75 = ssub.s32 %s14, 1
      // Predicated region
      $region13: #{tpu_custom_call.1} parent=11 // pred_check
        %p76 = pneg %p35
      $region14: #{tpu_custom_call.1} parent=11 // pred_check_branch
        %78 = sbr.rel (%p76) target = $region16
      $region15: #{tpu_custom_call.1} parent=11 // pred_region
        _
      $region16: #{tpu_custom_call.1} parent=11 // pred_fallthru
        _
    $region12: #{tpu_custom_call.1} parent=5 // pred_fallthru
      _
    %p79 = scmp.lt.s32.totalorder %s14, 25
    // Predicated region
    $region17: #{tpu_custom_call.1} parent=5 // pred_check
      %p80 = pneg %p79
    $region18: #{tpu_custom_call.1} parent=5 // pred_check_branch
      %82 = sbr.rel (%p80) target = $region20
    $region19: #{tpu_custom_call.1} parent=5 // pred_region
      _
    $region20: #{tpu_custom_call.1} parent=5 // pred_fallthru
      _
    %p83 = scmp.le.s32.totalorder 1, %s14
    %p84 = scmp.lt.s32.totalorder %s14, 26
    %p85 = pnand %p83, %p84
    %p86 = pneg %p85
    // Predicated region
    $region21: #{tpu_custom_call.1} parent=5 // pred_check
      _
    $region22: #{tpu_custom_call.1} parent=5 // pred_check_branch
      %88 = sbr.rel (%p85) target = $region24
    $region23: #{tpu_custom_call.1} parent=5 // pred_region
      %s89 = ssub.s32 %s14, 1
      %p90 = pneg %p35
      %p91 = pneg %p32
      %p92 = pneg %p61
      %p93 = pneg %p58
      %p94 = scmp.lt.s32.totalorder %s19, 24
      %s95 = scalar_select %p94, %s19, 24
      %s96 = smul.addr %s95, 8
      %s97 = scalar_lea.vmem %s2, %s96
      %p98 = scmp.lt.s32.totalorder %s19, 24
      %s99 = scalar_select %p98, %s19, 24
      %s100 = smul.addr %s99, 8
      %s101 = scalar_lea.vmem %s2, %s100
      %s102 = smul.u32 %s19, 8
      %s103 = sld [smem:[#allocation3 + %s102]]
      %p104 = scmp.gt.s32.totalorder %s103, 0
      %s105 = scalar_select %p104, %s103, 0
      %p106 = scmp.lt.s32.totalorder %s105, 63
      %s107 = scalar_select %p106, %s105, 63
      %s108 = scalar_lea.vmem %s1, %s107
      %v109 = vld [vmem:[%s108] sm:$0x1]
      %vm110 = vcmask 57344
      %111 = vst.msk [vmem:[%s101] sm:$0x1] %vm110, %v109
      %s112 = sadd.s32 %s102, 1
      %s113 = sld [smem:[#allocation3 + %s112]]
      %p114 = scmp.gt.s32.totalorder %s113, 0
      %s115 = scalar_select %p114, %s113, 0
      %p116 = scmp.lt.s32.totalorder %s115, 63
      %s117 = scalar_select %p116, %s115, 63
      %s118 = scalar_lea.vmem %s1, %s117
      %v119 = vld [vmem:[%s118] sm:$0x1]
      %120 = vst.msk [vmem:[%s101 + $0x1] sm:$0x1] %vm110, %v119
      %s121 = sadd.s32 %s102, 2
      %s122 = sld [smem:[#allocation3 + %s121]]
      %p123 = scmp.gt.s32.totalorder %s122, 0
      %s124 = scalar_select %p123, %s122, 0
      %p125 = scmp.lt.s32.totalorder %s124, 63
      %s126 = scalar_select %p125, %s124, 63
      %s127 = scalar_lea.vmem %s1, %s126
      %v128 = vld [vmem:[%s127] sm:$0x1]
      %129 = vst.msk [vmem:[%s101 + $0x2] sm:$0x1] %vm110, %v128
      %s130 = sadd.s32 %s102, 3
      %s131 = sld [smem:[#allocation3 + %s130]]
      %p132 = scmp.gt.s32.totalorder %s131, 0
      %s133 = scalar_select %p132, %s131, 0
      %p134 = scmp.lt.s32.totalorder %s133, 63
      %s135 = scalar_select %p134, %s133, 63
      %s136 = scalar_lea.vmem %s1, %s135
      %v137 = vld [vmem:[%s136] sm:$0x1]
      %138 = vst.msk [vmem:[%s101 + $0x3] sm:$0x1] %vm110, %v137
      %s139 = sadd.s32 %s102, 4
      %s140 = sld [smem:[#allocation3 + %s139]]
      %p141 = scmp.gt.s32.totalorder %s140, 0
      %s142 = scalar_select %p141, %s140, 0
      %p143 = scmp.lt.s32.totalorder %s142, 63
      %s144 = scalar_select %p143, %s142, 63
      %s145 = scalar_lea.vmem %s1, %s144
      %v146 = vld [vmem:[%s145] sm:$0x1]
      %147 = vst.msk [vmem:[%s101 + $0x4] sm:$0x1] %vm110, %v146
      %s148 = sadd.s32 %s102, 5
      %s149 = sld [smem:[#allocation3 + %s148]]
      %p150 = scmp.gt.s32.totalorder %s149, 0
      %s151 = scalar_select %p150, %s149, 0
      %p152 = scmp.lt.s32.totalorder %s151, 63
      %s153 = scalar_select %p152, %s151, 63
      %s154 = scalar_lea.vmem %s1, %s153
      %v155 = vld [vmem:[%s154] sm:$0x1]
      %156 = vst.msk [vmem:[%s101 + $0x5] sm:$0x1] %vm110, %v155
      %s157 = sadd.s32 %s102, 6
      %s158 = sld [smem:[#allocation3 + %s157]]
      %p159 = scmp.gt.s32.totalorder %s158, 0
      %s160 = scalar_select %p159, %s158, 0
      %p161 = scmp.lt.s32.totalorder %s160, 63
      %s162 = scalar_select %p161, %s160, 63
      %s163 = scalar_lea.vmem %s1, %s162
      %v164 = vld [vmem:[%s163] sm:$0x1]
      %165 = vst.msk [vmem:[%s101 + $0x6] sm:$0x1] %vm110, %v164
      %s166 = sadd.s32 %s102, 7
      %s167 = sld [smem:[#allocation3 + %s166]]
      %p168 = scmp.gt.s32.totalorder %s167, 0
      %s169 = scalar_select %p168, %s167, 0
      %p170 = scmp.lt.s32.totalorder %s169, 63
      %s171 = scalar_select %p170, %s169, 63
      %s172 = scalar_lea.vmem %s1, %s171
      %v173 = vld [vmem:[%s172] sm:$0x1]
      %174 = vst.msk [vmem:[%s101 + $0x7] sm:$0x1] %vm110, %v173
      %p175 = scmp.lt.s32.totalorder %s19, 24
      %s176 = scalar_select %p175, %s19, 24
      %s177 = smul.addr %s176, 8
      %s178 = scalar_lea.vmem %s2, %s177
      // Predicated region
      $region25: #{tpu_custom_call.1} parent=23 // pred_check
        %p179 = pneg %p58
      $region26: #{tpu_custom_call.1} parent=23 // pred_check_branch
        %181 = sbr.rel (%p179) target = $region28
      $region27: #{tpu_custom_call.1} parent=23 // pred_region
        _
      $region28: #{tpu_custom_call.1} parent=23 // pred_fallthru
        _
    $region24: #{tpu_custom_call.1} parent=5 // pred_fallthru
      _
    %p182 = scmp.le.s32.totalorder 2, %s14
    // Predicated region
    $region29: #{tpu_custom_call.1} parent=5 // pred_check
      %p183 = pneg %p182
    $region30: #{tpu_custom_call.1} parent=5 // pred_check_branch
      %185 = sbr.rel (%p183) target = $region32
    $region31: #{tpu_custom_call.1} parent=5 // pred_region
      %s186 = ssub.s32 %s14, 2
      // Predicated region
      $region33: #{tpu_custom_call.1} parent=31 // pred_check
        %p187 = pneg %p64
      $region34: #{tpu_custom_call.1} parent=31 // pred_check_branch
        %189 = sbr.rel (%p187) target = $region36
      $region35: #{tpu_custom_call.1} parent=31 // pred_region
        %p190 = scmp.lt.s32.totalorder %s20, 24
        %s191 = scalar_select %p190, %s20, 24
        %s192 = smul.addr %s191, 8
        %s193 = scalar_lea.vmem %s2, %s192
      $region36: #{tpu_custom_call.1} parent=31 // pred_fallthru
        _
    $region32: #{tpu_custom_call.1} parent=5 // pred_fallthru
      _
  $region6: #{tpu_custom_call.1} parent=0 // loop_footer
    %s18 = sadd.s32 1, %s14
  $region7: #{tpu_custom_call.1} parent=0 // loop_footer_branch
    %13 = sbr.rel target = $region3
  $region8: #{tpu_custom_call.1} parent=0 // loop_exit
    _

</llo_original>
